<compile_context>
chip_gen: v7x
topology: tpu7x:2x2x1
jax: 0.10.0
libtpu: 0.0.40
codegen_flags: <defaults>
</compile_context>

<pallas_src>
import jax
import jax.numpy as jnp
from jax.experimental import pallas as pl
from jax.experimental.pallas import tpu as pltpu


_NEG = -1e30  # "minus infinity" that stays finite through exp/log arithmetic


# ------------------------------ Pallas kernel ------------------------------

def _make_kernel(weights_resident):
    def kernel(x_ref, w_ref, b_ref, o_ref, s_ref):
        """Grid = (batch_tiles, num_members); member axis is the reduction.

        x_ref: (TB, Hp)  bf16 batch tile (same block for every member)
        w_ref: (M, Hp, Dp) resident  OR  (1, Hp, Dp) streamed  bf16 weights
        b_ref: (M, 1, Dp)  f32 biases, VMEM-resident (padded classes = -1e30)
        o_ref: (TB, Dp)   f32 output tile (written on the last member)
        s_ref: (TB, Dp)   f32 running sum of per-member softmaxes
        """
        m = pl.program_id(1)
        last = pl.num_programs(1) - 1

        @pl.when(m == 0)
        def _():
            s_ref[...] = jnp.zeros(s_ref.shape, dtype=s_ref.dtype)

        widx = m if weights_resident else 0
        logits = jnp.dot(x_ref[...], w_ref[widx],
                         preferred_element_type=jnp.float32)
        logits = logits + b_ref[m]                           # (TB, Dp) f32

        # Per-member softmax (rows sum to 1) -> member-axis logsumexp needs no
        # running max: accumulate sum of softmaxes, take log at the end.
        mx = jnp.max(logits, axis=-1, keepdims=True)
        e = jnp.exp(logits - mx)                              # one full-tile exp
        inv = pl.reciprocal(jnp.sum(e, axis=-1, keepdims=True), approx=True)
        s_ref[...] += e * inv

        @pl.when(m == last)
        def _():
            o_ref[...] = jnp.log(s_ref[...]).astype(o_ref.dtype)

    return kernel


# ------------------------------ host wrapper -------------------------------

def _round_up(v, m):
    return (v + m - 1) // m * m


def ensemble_forward(x, weights, biases):
    """x: (B, H); weights: (M, H, D); biases: (M, D)  ->  (B, D)

    out = logsumexp_m( log_softmax_d( x @ W_m + b_m ) )
    """
    B, H = x.shape
    M, _, D = weights.shape

    # Lane-dense classes: 128-multiples for tiny heads, 256-multiples for the
    # 256-wide MXUs on v6e/v7x once D is large enough to matter.
    D_pad = _round_up(D, 128) if D <= 128 else _round_up(D, 256)
    # Contraction dim padded to a multiple of 16 (bf16 sublane packing /
    # aligned dynamic member indexing); zero padding is mathematically neutral.
    H_pad = _round_up(H, 16)

    # Batch tile: large (up to 512) for weight-stream arithmetic intensity,
    # but keep >= 2 tiles on the "parallel" axis when the batch allows (v7x).
    B8 = _round_up(B, 8)
    TB = min(512, B8)
    if B8 > 8 and B8 // TB < 2:
        TB = max(8, _round_up(B8 // 2, 8))
    B_pad = _round_up(B, TB)

    x_p = jnp.pad(x, ((0, B_pad - B), (0, H_pad - H))).astype(jnp.bfloat16)
    w_p = jnp.pad(weights, ((0, 0), (0, H_pad - H), (0, D_pad - D))
                  ).astype(jnp.bfloat16)
    # Padded class columns get a huge negative f32 bias so they contribute
    # nothing to the per-member softmax (and are sliced off at the end).
    b_p = jnp.pad(biases.astype(jnp.float32), ((0, 0), (0, D_pad - D)),
                  constant_values=_NEG).reshape(M, 1, D_pad)

    grid = (B_pad // TB, M)

    # VMEM-resident weights when they comfortably fit; otherwise stream them
    # per member with a deeper pipeline to hide the HBM latency.
    w_bytes = M * H_pad * D_pad * 2
    weights_resident = w_bytes <= (8 << 20)
    if weights_resident:
        w_spec = pl.BlockSpec((M, H_pad, D_pad), lambda i, m: (0, 0, 0))
    else:
        w_spec = pl.BlockSpec((1, H_pad, D_pad), lambda i, m: (m, 0, 0),
                              pipeline_mode=pl.Buffered(3))
    b_spec = pl.BlockSpec((M, 1, D_pad), lambda i, m: (0, 0, 0))  # resident

    # Explicit VMEM budget (double-buffered x/out, weights, bias, accumulator)
    # with headroom; capped at 64 MiB so the same config fits v7x.
    est = (2 * TB * H_pad * 2
           + (M if weights_resident else 3) * H_pad * D_pad * 2
           + M * D_pad * 4
           + 2 * TB * D_pad * 4
           + TB * D_pad * 4)
    vmem_limit = int(min(max(2 * est + (8 << 20), 32 << 20), 64 << 20))

    cost = pl.CostEstimate(
        flops=2 * B_pad * H_pad * D_pad * M,
        transcendentals=B_pad * D_pad * M,
        bytes_accessed=(x_p.size * 2 + w_p.size * 2 + b_p.size * 4
                        + B_pad * D_pad * 4),
    )

    out_p = pl.pallas_call(
        _make_kernel(weights_resident),
        out_shape=jax.ShapeDtypeStruct((B_pad, D_pad), jnp.float32),
        grid_spec=pltpu.PrefetchScalarGridSpec(
            num_scalar_prefetch=0,
            grid=grid,
            in_specs=[
                pl.BlockSpec((TB, H_pad), lambda i, m: (i, 0)),   # x tile
                w_spec,                                           # weights
                b_spec,                                           # biases
            ],
            out_specs=pl.BlockSpec((TB, D_pad), lambda i, m: (i, 0)),
            scratch_shapes=[
                pltpu.VMEM((TB, D_pad), jnp.float32),   # sum of softmaxes
            ],
        ),
        compiler_params=pltpu.CompilerParams(
            dimension_semantics=("parallel", "arbitrary"),
            vmem_limit_bytes=vmem_limit,
        ),
        cost_estimate=cost,
    )(x_p, w_p, b_p)

    return out_p[:B, :D]


# ----------------------------------- main -----------------------------------

if __name__ == "__main__":
    key = jax.random.PRNGKey(0)
    k_x, k_w, k_b = jax.random.split(key, 3)

    M_models, B, H, D = 4, 2, 32, 10  # 4 ensemble members, tiny classifier

    x = jax.random.normal(k_x, (B, H), dtype=jnp.float32)
    W = jax.random.normal(k_w, (M_models, H, D), dtype=jnp.float32) / jnp.sqrt(H)
    b = 0.1 * jax.random.normal(k_b, (M_models, D), dtype=jnp.float32)

    out = jax.block_until_ready(ensemble_forward(x, W, b))

    # Pure-JAX reference mirroring the PyTorch module; operands are rounded to
    # bf16 exactly as the kernel's MXU sees them (bias/softmax stay f32).
    def _lse(a, axis, keepdims=False):
        mx = jnp.max(a, axis=axis, keepdims=True)
        r = mx + jnp.log(jnp.sum(jnp.exp(a - mx), axis=axis, keepdims=True))
        return r if keepdims else jnp.squeeze(r, axis=axis)

    x_q = x.astype(jnp.bfloat16).astype(jnp.float32)
    W_q = W.astype(jnp.bfloat16).astype(jnp.float32)
    logits = jnp.einsum("bh,mhd->mbd", x_q, W_q) + b[:, None, :]  # model(x) stack
    xs = logits - _lse(logits, axis=-1, keepdims=True)            # log-softmax
    ref = _lse(xs, axis=0)                                        # combine members

    assert out.shape == (B, D), out.shape
    err = float(jnp.max(jnp.abs(out - ref)))
    assert err < 2e-3, err

    print("KERNEL_OK")
</pallas_src>

<mosaic_0001>
module attributes {stable_mosaic.version = 11 : i64} {
  func.func @kernel(%arg0: i32, %arg1: i32, %arg2: memref<8x32xbf16, #tpu.memory_space<vmem>>, %arg3: memref<4x32x128xbf16, #tpu.memory_space<vmem>>, %arg4: memref<4x1x128xf32, #tpu.memory_space<vmem>>, %arg5: memref<8x128xf32, #tpu.memory_space<vmem>>, %arg6: memref<8x128xf32, #tpu.memory_space<vmem>>) attributes {dimension_semantics = [#tpu.dimension_semantics<parallel>, #tpu.dimension_semantics<arbitrary>], iteration_bounds = array<i64: 1, 4>, scalar_prefetch = 0 : i64, scratch_operands = 1 : i64, tpu.core_type = #tpu.core_type<tc>, window_params = [{transform_indices = @transform_0, window_bounds = array<i64: 8, 32>}, {pipeline_mode = #tpu.pipeline_mode<synchronous>, transform_indices = @transform_1, window_bounds = array<i64: 4, 32, 128>}, {pipeline_mode = #tpu.pipeline_mode<synchronous>, transform_indices = @transform_2, window_bounds = array<i64: 4, 1, 128>}, {transform_indices = @transform_3, window_bounds = array<i64: 8, 128>}]} {
    %c0_i32 = arith.constant 0 : i32
    %0 = arith.cmpi eq, %arg1, %c0_i32 : i32
    %1 = arith.extui %0 : i1 to i32
    %c0_i32_0 = arith.constant 0 : i32
    %2 = arith.cmpi ne, %1, %c0_i32_0 : i32
    scf.if %2 {
      %cst_13 = arith.constant 0.000000e+00 : f32
      %29 = vector.broadcast %cst_13 : f32 to vector<8x128xf32>
      %c0_14 = arith.constant 0 : index
      %c0_15 = arith.constant 0 : index
      %30 = vector.load %arg6[%c0_14, %c0_15] : memref<8x128xf32, #tpu.memory_space<vmem>>, vector<8x128xf32>
      tpu.vector_store %arg6[%c0_14, %c0_15], %29 {strides = array<i32>} : memref<8x128xf32, #tpu.memory_space<vmem>>, vector<8x128xf32>,
    } else {
    }
    %c0 = arith.constant 0 : index
    %c0_1 = arith.constant 0 : index
    %3 = vector.load %arg2[%c0, %c0_1] : memref<8x32xbf16, #tpu.memory_space<vmem>>, vector<8x32xbf16>
    %4 = arith.index_cast %arg1 : i32 to index
    %c0_2 = arith.constant 0 : index
    %c0_3 = arith.constant 0 : index
    %5 = vector.load %arg3[%4, %c0_2, %c0_3] : memref<4x32x128xbf16, #tpu.memory_space<vmem>>, vector<1x32x128xbf16>
    %6 = vector.shape_cast %5 : vector<1x32x128xbf16> to vector<32x128xbf16>
    %cst = arith.constant dense<0.000000e+00> : vector<8x128xf32>
    %7 = tpu.matmul %3, %6, %cst {dimension_numbers = #tpu.dot_dimension_numbers<[1], [0], [0], [1], [0, 0, 1, 1], [], []>} : vector<8x32xbf16>, vector<32x128xbf16>, vector<8x128xf32> -> vector<8x128xf32>
    %8 = arith.index_cast %arg1 : i32 to index
    %c0_4 = arith.constant 0 : index
    %c0_5 = arith.constant 0 : index
    %9 = vector.load %arg4[%8, %c0_4, %c0_5] : memref<4x1x128xf32, #tpu.memory_space<vmem>>, vector<1x1x128xf32>
    %10 = vector.shape_cast %9 : vector<1x1x128xf32> to vector<1x128xf32>
    %11 = vector.broadcast %10 : vector<1x128xf32> to vector<8x128xf32>
    %12 = arith.addf %7, %11 : vector<8x128xf32>
    %cst_6 = arith.constant dense<0xFF800000> : vector<8xf32>
    %13 = vector.multi_reduction <maximumf>, %12, %cst_6 [1] : vector<8x128xf32> to vector<8xf32>
    %14 = vector.shape_cast %13 : vector<8xf32> to vector<8x1xf32>
    %15 = vector.broadcast %14 : vector<8x1xf32> to vector<8x128xf32>
    %16 = arith.subf %12, %15 : vector<8x128xf32>
    %17 = math.exp %16 : vector<8x128xf32>
    %cst_7 = arith.constant dense<0.000000e+00> : vector<8xf32>
    %18 = vector.multi_reduction <add>, %17, %cst_7 [1] : vector<8x128xf32> to vector<8xf32>
    %19 = vector.shape_cast %18 : vector<8xf32> to vector<8x1xf32>
    %20 = tpu.reciprocal %19 {approx = true} : vector<8x1xf32> -> vector<8x1xf32>
    %c0_8 = arith.constant 0 : index
    %c0_9 = arith.constant 0 : index
    %21 = vector.load %arg6[%c0_8, %c0_9] : memref<8x128xf32, #tpu.memory_space<vmem>>, vector<8x128xf32>
    %22 = vector.broadcast %20 : vector<8x1xf32> to vector<8x128xf32>
    %23 = arith.mulf %17, %22 : vector<8x128xf32>
    %24 = arith.addf %21, %23 : vector<8x128xf32>
    %c0_10 = arith.constant 0 : index
    %c0_11 = arith.constant 0 : index
    %25 = vector.load %arg6[%c0_10, %c0_11] : memref<8x128xf32, #tpu.memory_space<vmem>>, vector<8x128xf32>
    tpu.vector_store %arg6[%c0_10, %c0_11], %24 {strides = array<i32>} : memref<8x128xf32, #tpu.memory_space<vmem>>, vector<8x128xf32>,
    %c3_i32 = arith.constant 3 : i32
    %26 = arith.cmpi eq, %arg1, %c3_i32 : i32
    %27 = arith.extui %26 : i1 to i32
    %c0_i32_12 = arith.constant 0 : i32
    %28 = arith.cmpi ne, %27, %c0_i32_12 : i32
    scf.if %28 {
      %c0_13 = arith.constant 0 : index
      %c0_14 = arith.constant 0 : index
      %29 = vector.load %arg6[%c0_13, %c0_14] : memref<8x128xf32, #tpu.memory_space<vmem>>, vector<8x128xf32>
      %30 = math.log %29 : vector<8x128xf32>
      %c0_15 = arith.constant 0 : index
      %c0_16 = arith.constant 0 : index
      %31 = vector.load %arg5[%c0_15, %c0_16] : memref<8x128xf32, #tpu.memory_space<vmem>>, vector<8x128xf32>
      tpu.vector_store %arg5[%c0_15, %c0_16], %30 {strides = array<i32>} : memref<8x128xf32, #tpu.memory_space<vmem>>, vector<8x128xf32>,
    } else {
    }
    return
  }
  func.func @transform_0(%arg0: i32, %arg1: i32) -> (i32, i32) {
    %c0_i32 = arith.constant 0 : i32
    %c0_i32_0 = arith.constant 0 : i32
    return %arg0, %c0_i32 : i32, i32
  }
  func.func @transform_1(%arg0: i32, %arg1: i32) -> (i32, i32, i32) {
    %c0_i32 = arith.constant 0 : i32
    %c0_i32_0 = arith.constant 0 : i32
    %c0_i32_1 = arith.constant 0 : i32
    %c0_i32_2 = arith.constant 0 : i32
    return %c0_i32, %c0_i32_0, %c0_i32_1 : i32, i32, i32
  }
  func.func @transform_2(%arg0: i32, %arg1: i32) -> (i32, i32, i32) {
    %c0_i32 = arith.constant 0 : i32
    %c0_i32_0 = arith.constant 0 : i32
    %c0_i32_1 = arith.constant 0 : i32
    %c0_i32_2 = arith.constant 0 : i32
    return %c0_i32, %c0_i32_0, %c0_i32_1 : i32, i32, i32
  }
  func.func @transform_3(%arg0: i32, %arg1: i32) -> (i32, i32) {
    %c0_i32 = arith.constant 0 : i32
    %c0_i32_0 = arith.constant 0 : i32
    return %arg0, %c0_i32 : i32, i32
  }
}

</mosaic_0001>

<llo_original>
// kernel: tpu_custom_call.1
$region0: #{tpu_custom_call.1}
  #allocation0 [shape = 'u32[]', space=smem, size = 0x4, offset = 0x4, fixed_abs, tag = 'smem constant byte address 0x4 - core index']
  #allocation1 [shape = 'u32[144,128]{1,0:T(1,128)}', space=vmem, size = 0x12000, scoped, tag = 'internal scratch']
  #allocation2 [shape = 'f32[8,128]{1,0:T(8,128)}', space=vmem, size = 0x1000, scoped, tag = 'scratch operand']
  %s0 = inlined_call_operand.hbm [shape: bf16[8,32], index: 0, kind: input, shape index: {}]
  %s1 = inlined_call_operand.hbm [shape: bf16[4,32,128], index: 1, kind: input, shape index: {}]
  %s2 = inlined_call_operand.vmem [shape: f32[4,1,128], index: 2, kind: input, shape index: {}]
  %s3 = inlined_call_operand.hbm [shape: f32[8,128], index: 3, kind: output, shape index: {}]
  %s4 = sld [smem:[#allocation0]]
  $region61: #{tpu_custom_call.1} parent=0
    _
  %s6 = ssub.s32 1, %s4
  %s7 = scalar_select 0, %s6, %s4
  $region1: #{tpu_custom_call.1} parent=0
    #allocation3 [shape = 'u8[2048]{0}', space=vmem, size = 0x800, scoped, tag = 'input window, operand 0, single buffered']
    #allocation4 [shape = 's32[2]{0}', space=sflag, size = 0x8, scoped, tag = 'scoped memory for tpu_custom_call.1']
    #allocation5 [shape = 's32[2]{0}', space=sflag, size = 0x8, scoped, tag = 'scoped memory for tpu_custom_call.1']
    #allocation6 [shape = 'u8[32768]{0}', space=vmem, size = 0x8000, scoped, tag = 'input window, operand 1, single buffered']
    #allocation7 [shape = 's32[1]{0}', space=sflag, size = 0x4, scoped, tag = 'scoped memory for tpu_custom_call.1']
    #allocation8 [shape = 'u8[4096]{0}', space=vmem, size = 0x1000, scoped, tag = 'output window, operand 0, single buffered']
    %8 = vsyncpa [#allocation4], 0
    %9 = vsyncpa [#allocation7], 0
    %10 = vsyncpa [#allocation5], 0
    loop: start=0, step=1, limit=6
    $region2: #{tpu_custom_call.1} parent=1 // loop_pre_header
      _
    $region3: #{tpu_custom_call.1} parent=1 // loop_header
      %s12 = sphi 0, %s16
      %p13 = scmp.ge.s32.totalorder %s12, 6
      %s19 = sphi 0, %s31
      %s20 = sphi 0, %s27
      %s21 = sphi 0, %s19
      %s22 = sphi 0, %s20
      %s23 = sphi 0, %s21
      %s24 = sphi 0, %s22
      %s34 = sphi 0, %s36
      %s37 = sphi 0, %s34
      %s38 = sphi 0, %s37
      %s54 = sphi 0, %s38
      %s58 = sphi 0, %s58
      %s60 = sphi 0, %s58
      %s61 = sphi 0, %s60
      %s75 = sphi 0, %s61
      %s79 = sphi 0, %s79
      %s81 = sphi 0, %s79
      %s82 = sphi 0, %s81
      %s96 = sphi 0, %s82
      %s102 = sphi 0, %s104
      %s105 = sphi 0, %s102
      %s106 = sphi 0, %s105
      %s122 = sphi 0, %s106
    $region4: #{tpu_custom_call.1} parent=1 // loop_header_branch
      %15 = sbr.rel (%p13) target = $region8
    $region5: #{tpu_custom_call.1} parent=1 // loop_body
      %s17 = ssub.s32 %s12, 1
      %s18 = ssub.s32 %s12, 2
      %s25 = sadd.s32 1, %s20
      %p26 = scmp.ge.s32.totalorder %s25, 4
      %s27 = scalar_select %p26, 0, %s25
      %s28 = sadd.s32 1, %s19
      %s29 = scalar_select %p26, %s28, %s19
      %p30 = scmp.ge.s32.totalorder %s29, 1
      %s31 = scalar_select %p30, 0, %s29
      %s32 = ssub.s32 %s19, %s31
      %p33 = scmp.eq.s32.totalorder %s32, 0
      %s35 = sadd.s32 %s34, 1
      %s36 = scalar_select %p33, %s34, %s35
      %p39 = pneg %p33
      %p40 = scmp.eq.s32.totalorder %s12, 3
      %p41 = por %p39, %p40
      %p42 = scmp.ne.s32.totalorder %s34, %s37
      %p43 = scmp.eq.s32.totalorder %s12, 0
      %p44 = por %p42, %p43
      %p45 = scmp.ne.s32.totalorder %s34, %s37
      %p46 = scmp.eq.s32.totalorder %s17, 3
      %p47 = por %p45, %p46
      %p48 = scmp.ne.s32.totalorder %s37, %s38
      %p49 = scmp.eq.s32.totalorder %s17, 0
      %p50 = por %p48, %p49
      %p51 = scmp.ne.s32.totalorder %s37, %s38
      %p52 = scmp.eq.s32.totalorder %s18, 3
      %p53 = por %p51, %p52
      %p55 = scmp.ne.s32.totalorder %s38, %s54
      %p56 = scmp.eq.s32.totalorder %s18, 0
      %p57 = por %p55, %p56
      %s59 = sadd.s32 %s58, 1
      %p62 = scmp.eq.s32.totalorder %s12, 3
      %p63 = scmp.ne.s32.totalorder %s58, %s60
      %p64 = scmp.eq.s32.totalorder %s12, 0
      %p65 = por %p63, %p64
      %p66 = scmp.ne.s32.totalorder %s58, %s60
      %p67 = scmp.eq.s32.totalorder %s17, 3
      %p68 = por %p66, %p67
      %p69 = scmp.ne.s32.totalorder %s60, %s61
      %p70 = scmp.eq.s32.totalorder %s17, 0
      %p71 = por %p69, %p70
      %p72 = scmp.ne.s32.totalorder %s60, %s61
      %p73 = scmp.eq.s32.totalorder %s18, 3
      %p74 = por %p72, %p73
      %p76 = scmp.ne.s32.totalorder %s61, %s75
      %p77 = scmp.eq.s32.totalorder %s18, 0
      %p78 = por %p76, %p77
      %s80 = sadd.s32 %s79, 1
      %p83 = scmp.eq.s32.totalorder %s12, 3
      %p84 = scmp.ne.s32.totalorder %s79, %s81
      %p85 = scmp.eq.s32.totalorder %s12, 0
      %p86 = por %p84, %p85
      %p87 = scmp.ne.s32.totalorder %s79, %s81
      %p88 = scmp.eq.s32.totalorder %s17, 3
      %p89 = por %p87, %p88
      %p90 = scmp.ne.s32.totalorder %s81, %s82
      %p91 = scmp.eq.s32.totalorder %s17, 0
      %p92 = por %p90, %p91
      %p93 = scmp.ne.s32.totalorder %s81, %s82
      %p94 = scmp.eq.s32.totalorder %s18, 3
      %p95 = por %p93, %p94
      %p97 = scmp.ne.s32.totalorder %s82, %s96
      %p98 = scmp.eq.s32.totalorder %s18, 0
      %p99 = por %p97, %p98
      %s100 = ssub.s32 %s19, %s31
      %p101 = scmp.eq.s32.totalorder %s100, 0
      %s103 = sadd.s32 %s102, 1
      %s104 = scalar_select %p101, %s102, %s103
      %p107 = pneg %p101
      %p108 = scmp.eq.s32.totalorder %s12, 3
      %p109 = por %p107, %p108
      %p110 = scmp.ne.s32.totalorder %s102, %s105
      %p111 = scmp.eq.s32.totalorder %s12, 0
      %p112 = por %p110, %p111
      %p113 = scmp.ne.s32.totalorder %s102, %s105
      %p114 = scmp.eq.s32.totalorder %s17, 3
      %p115 = por %p113, %p114
      %p116 = scmp.ne.s32.totalorder %s105, %s106
      %p117 = scmp.eq.s32.totalorder %s17, 0
      %p118 = por %p116, %p117
      %p119 = scmp.ne.s32.totalorder %s105, %s106
      %p120 = scmp.eq.s32.totalorder %s18, 3
      %p121 = por %p119, %p120
      %p123 = scmp.ne.s32.totalorder %s106, %s122
      %p124 = scmp.eq.s32.totalorder %s18, 0
      %p125 = por %p123, %p124
      %p126 = scmp.le.s32.totalorder 1, %s12
      %p127 = scmp.lt.s32.totalorder %s12, 5
      %p128 = pnand %p126, %p127
      %p129 = pneg %p128
      // Predicated region
      $region9: #{tpu_custom_call.1} parent=5 // pred_check
        _
      $region10: #{tpu_custom_call.1} parent=5 // pred_check_branch
        %131 = sbr.rel (%p128) target = $region12
      $region11: #{tpu_custom_call.1} parent=5 // pred_region
        %s132 = ssub.s32 %s12, 1
        // Predicated region
        $region13: #{tpu_custom_call.1} parent=11 // pred_check
          %p133 = pneg %p50
        $region14: #{tpu_custom_call.1} parent=11 // pred_check_branch
          %135 = sbr.rel (%p133) target = $region16
        $region15: #{tpu_custom_call.1} parent=11 // pred_region
          %s137 = ssub.s32 64, 64
          %138 = vsyncadd [#allocation4], %s137
          %s139 = smul.addr %s21, 64
          %s140 = scalar_lea.hbm %s0, %s139
          %s142 = sshll.u32 [#allocation3], 4
          %s143 = int_to_ptr.vmem [resolvable:$true] %s142
          %145 = dma.hbm_to_vmem [thread:$0]  %s140, 64, %s143, [#allocation4]
        $region16: #{tpu_custom_call.1} parent=11 // pred_fallthru
          _
        // Predicated region
        $region17: #{tpu_custom_call.1} parent=11 // pred_check
          %p146 = pneg %p71
        $region18: #{tpu_custom_call.1} parent=11 // pred_check_branch
          %148 = sbr.rel (%p146) target = $region20
        $region19: #{tpu_custom_call.1} parent=11 // pred_region
          %s150 = ssub.s32 1024, 1024
          %151 = vsyncadd [#allocation7], %s150
          %s152 = sshll.u32 [#allocation6], 4
          %s153 = int_to_ptr.vmem [resolvable:$true] %s152
          %158 = dma.hbm_to_vmem [thread:$0]  %s1, 1024, %s153, [#allocation7], 64, 64, 4
        $region20: #{tpu_custom_call.1} parent=11 // pred_fallthru
          _
        // Predicated region
        $region21: #{tpu_custom_call.1} parent=11 // pred_check
          %p159 = pneg %p92
        $region22: #{tpu_custom_call.1} parent=11 // pred_check_branch
          %161 = sbr.rel (%p159) target = $region24
        $region23: #{tpu_custom_call.1} parent=11 // pred_region
          _
        $region24: #{tpu_custom_call.1} parent=11 // pred_fallthru
          _
      $region12: #{tpu_custom_call.1} parent=5 // pred_fallthru
        _
      %p162 = scmp.lt.s32.totalorder %s12, 4
      // Predicated region
      $region25: #{tpu_custom_call.1} parent=5 // pred_check
        %p163 = pneg %p162
      $region26: #{tpu_custom_call.1} parent=5 // pred_check_branch
        %165 = sbr.rel (%p163) target = $region28
      $region27: #{tpu_custom_call.1} parent=5 // pred_region
        _
      $region28: #{tpu_custom_call.1} parent=5 // pred_fallthru
        _
      %p166 = scmp.le.s32.totalorder 1, %s12
      %p167 = scmp.lt.s32.totalorder %s12, 5
      %p168 = pnand %p166, %p167
      %p169 = pneg %p168
      // Predicated region
      $region29: #{tpu_custom_call.1} parent=5 // pred_check
        _
      $region30: #{tpu_custom_call.1} parent=5 // pred_check_branch
        %171 = sbr.rel (%p168) target = $region32
      $region31: #{tpu_custom_call.1} parent=5 // pred_region
        %s172 = ssub.s32 %s12, 1
        // Predicated region
        $region33: #{tpu_custom_call.1} parent=31 // pred_check
          %p173 = pneg %p50
        $region34: #{tpu_custom_call.1} parent=31 // pred_check_branch
          %175 = sbr.rel (%p173) target = $region36
        $region35: #{tpu_custom_call.1} parent=31 // pred_region
          %176 = dma.done [#allocation4], 64
        $region36: #{tpu_custom_call.1} parent=31 // pred_fallthru
          _
        // Predicated region
        $region37: #{tpu_custom_call.1} parent=31 // pred_check
          %p177 = pneg %p71
        $region38: #{tpu_custom_call.1} parent=31 // pred_check_branch
          %179 = sbr.rel (%p177) target = $region40
        $region39: #{tpu_custom_call.1} parent=31 // pred_region
          %180 = dma.done [#allocation7], 1024
        $region40: #{tpu_custom_call.1} parent=31 // pred_fallthru
          _
        %p181 = pneg %p50
        %p182 = pneg %p47
        %p183 = pneg %p71
        %p184 = pneg %p68
        %p185 = pneg %p92
        %p186 = pneg %p89
        %p187 = pneg %p118
        %p188 = pneg %p115
        %p190 = scmp.eq.s32.totalorder %s22, 0
        // Predicated region
        $region41: #{tpu_custom_call.1} parent=31 // pred_check
          %p191 = pneg %p190
        $region42: #{tpu_custom_call.1} parent=31 // pred_check_branch
          %193 = sbr.rel (%p191) target = $region44
        $region43: #{tpu_custom_call.1} parent=31 // pred_region
          %194 = vst [vmem:[#allocation2] sm:$0xff] 0.0
        $region44: #{tpu_custom_call.1} parent=31 // pred_fallthru
          _
        %v195 = vld [vmem:[#allocation3] sm:$0xf]
        %s196 = smul.u32 %s22, 4
        %s197 = smul.addr %s196, 4
        %s198 = scalar_lea.vmem [#allocation6], %s197
        %v199 = vld [vmem:[%s198] sm:$0xf]
        %v200 = vld [vmem:[%s198 + $0x4] sm:$0xf]
        %v201 = vld [vmem:[%s198 + $0x8] sm:$0xf]
        %v202 = vld [vmem:[%s198 + $0xc] sm:$0xf]
        %s203 = scalar_lea.vmem %s2, %s22
        %v204 = vld [vmem:[%s203] sm:$0x1]
        %v206 = vlaneseq
        %v207 = vshrl.u32 %v206, 7
        %v208 = vsub.s32 0, %v207
        %v209 = vrot.slane %v204, %v208
        %v215 = vunpack.c.l.b16 %v199
        %v216 = vunpack.c.l.b16 %v200
        %v217 = vunpack.c.l.b16 %v201
        %v218 = vunpack.c.l.b16 %v202
        %v219 = vpack.c.b16 %v216, %v215
        %v220 = vpack.c.b16 %v218, %v217
        %vm223 = vcmask 261120
        %v225 = vsel %vm223, %v195, 0
        %227 = vmatprep.subr.bf16.mxu0 0
        %228 = vmatpush1.bf16.msra.mxu0 %v219
        %229 = vmatprep.subr.bf16.mxu0 0
        %230 = vmatpush1.bf16.msra.mxu0 %v220
        %231 = vmatprep.subr.bf16.mxu0 0
        %232 = vmatpush1.bf16.msra.mxu0 0
        %233 = vmatprep.subr.bf16.mxu0 0
        %234 = vmatpush1.bf16.msra.mxu0 0
        %235 = vmatprep.subr.bf16.mxu0 0
        %236 = vmatpush1.bf16.msra.mxu0 0
        %237 = vmatprep.subr.bf16.mxu0 0
        %238 = vmatpush1.bf16.msra.mxu0 0
        %239 = vmatprep.subr.bf16.mxu0 0
        %240 = vmatpush1.bf16.msra.mxu0 0
        %241 = vmatprep.subr.bf16.mxu0 0
        %242 = vmatpush1.bf16.msra.mxu0 0
        %243 = vmatprep.subr.bf16.mxu0 0
        %244 = vmatpush1.bf16.msra.mxu0 0
        %245 = vmatprep.subr.bf16.mxu0 0
        %246 = vmatpush1.bf16.msra.mxu0 0
        %247 = vmatprep.subr.bf16.mxu0 0
        %248 = vmatpush1.bf16.msra.mxu0 0
        %249 = vmatprep.subr.bf16.mxu0 0
        %250 = vmatpush1.bf16.msra.mxu0 0
        %251 = vmatprep.subr.bf16.mxu0 0
        %252 = vmatpush1.bf16.msra.mxu0 0
        %253 = vmatprep.subr.bf16.mxu0 0
        %254 = vmatpush1.bf16.msra.mxu0 0
        %255 = vmatprep.subr.bf16.mxu0 0
        %256 = vmatpush1.bf16.msra.mxu0 0
        %257 = vmatprep.subr.bf16.mxu0 0
        %258 = vmatpush1.bf16.msra.mxu0 0
        %259 = vmatprep.mubr.bf16.mxu0 0
        %260 = vmatmul.mubr.bf16.gmra.mrb[0].mxu0 %v225
        %v261 = vpop.f32.mrb[0].mxu0
        %v262 = vadd.f32 %v209, %v261
        %v263 = vpop.f32.mrb[0].mxu0
        %v264 = vpop.f32.mrb[0].mxu0
        %v265 = vpop.f32.mrb[0].mxu0
        %266 = vdwg.mxu0
        %267 = vmax.xlane.f32.xlu0 %v262
        %v268 = vpop.xlane.xlu0 %267
        %v269 = vsub.f32 %v262, %v268
        %v270 = vmul.f32 %v269, 1.442695
        %v271 = vpow.pop %v270
        %272 = vadd.xlane.f32.xlu0 %v271
        %v273 = vpop.xlane.xlu0 %272
        %v274 = vrcp.pop %v273
        %v275 = vld [vmem:[#allocation2] sm:$0xff]
        %v276 = vmul.f32 %v271, %v274
        %v277 = vadd.f32 %v275, %v276
        %278 = vst [vmem:[#allocation2] sm:$0xff] %v277
        %p279 = scmp.eq.s32.totalorder %s22, 3
        // Predicated region
        $region45: #{tpu_custom_call.1} parent=31 // pred_check
          %p280 = pneg %p279
        $region46: #{tpu_custom_call.1} parent=31 // pred_check_branch
          %282 = sbr.rel (%p280) target = $region48
        $region47: #{tpu_custom_call.1} parent=31 // pred_region
          %v283 = vld [vmem:[#allocation2] sm:$0xff]
          %v284 = vlog2.pop %v283
          %v285 = vmul.f32 %v284, 0.6931472
          %286 = vst [vmem:[#allocation8] sm:$0xff] %v285
        $region48: #{tpu_custom_call.1} parent=31 // pred_fallthru
          _
        // Predicated region
        $region49: #{tpu_custom_call.1} parent=31 // pred_check
          %p287 = pneg %p115
        $region50: #{tpu_custom_call.1} parent=31 // pred_check_branch
          %289 = sbr.rel (%p287) target = $region52
        $region51: #{tpu_custom_call.1} parent=31 // pred_region
          %s291 = ssub.s32 128, 128
          %292 = vsyncadd [#allocation5], %s291
          %s293 = smul.addr %s21, 128
          %s294 = scalar_lea.hbm %s3, %s293
          %s296 = sshll.u32 [#allocation8], 4
          %s297 = int_to_ptr.vmem [resolvable:$true] %s296
          %299 = dma.vmem_to_hbm [thread:$0]  %s297, 128, %s294, [#allocation5]
        $region52: #{tpu_custom_call.1} parent=31 // pred_fallthru
          _
        // Predicated region
        $region53: #{tpu_custom_call.1} parent=31 // pred_check
          %p300 = pneg %p115
        $region54: #{tpu_custom_call.1} parent=31 // pred_check_branch
          %302 = sbr.rel (%p300) target = $region56
        $region55: #{tpu_custom_call.1} parent=31 // pred_region
          %303 = dma.done [#allocation5], 128
        $region56: #{tpu_custom_call.1} parent=31 // pred_fallthru
          _
      $region32: #{tpu_custom_call.1} parent=5 // pred_fallthru
        _
      %p304 = scmp.le.s32.totalorder 2, %s12
      // Predicated region
      $region57: #{tpu_custom_call.1} parent=5 // pred_check
        %p305 = pneg %p304
      $region58: #{tpu_custom_call.1} parent=5 // pred_check_branch
        %307 = sbr.rel (%p305) target = $region60
      $region59: #{tpu_custom_call.1} parent=5 // pred_region
        %s308 = ssub.s32 %s12, 2
      $region60: #{tpu_custom_call.1} parent=5 // pred_fallthru
        _
    $region6: #{tpu_custom_call.1} parent=1 // loop_footer
      %s16 = sadd.s32 1, %s12
    $region7: #{tpu_custom_call.1} parent=1 // loop_footer_branch
      %11 = sbr.rel target = $region3
    $region8: #{tpu_custom_call.1} parent=1 // loop_exit
      _
    %309 = vsyncpa [#allocation4], 1
    %s310 = scalar_lea.sflag [#allocation4], 1
    %311 = vsyncpa %s310, 1
    %312 = vsyncpa [#allocation7], 1
    %313 = vsyncpa [#allocation5], 1
    %s314 = scalar_lea.sflag [#allocation5], 1
    %315 = vsyncpa %s314, 1

</llo_original>
